<compile_context>
chip_gen: v7x
topology: tpu7x:2x2x1
jax: 0.10.0
libtpu: 0.0.40
codegen_flags: <defaults>
</compile_context>

<pallas_src>
import functools

import jax
import jax.numpy as jnp
from jax import lax
from jax.experimental import pallas as pl
from jax.experimental.pallas import tpu as pltpu


def _uniform_bits(shape, base_u32, salt):
    """Counter-based uint32 hash (splitmix32 finalizer) over element indices.

    Portable (plain integer VPU ops), so it lowers both on real TPUs and under
    the Pallas interpreter -- unlike pltpu.prng_seed / prng_random_bits.
    """
    r = lax.broadcasted_iota(jnp.int32, shape, 0)
    c = lax.broadcasted_iota(jnp.int32, shape, 1)
    x = (r * shape[1] + c).astype(jnp.uint32) + base_u32 + jnp.uint32(salt)
    x = (x ^ (x >> 16)) * jnp.uint32(0x7FEB352D)
    x = (x ^ (x >> 15)) * jnp.uint32(0x846CA68B)
    return x ^ (x >> 16)


def mlp_kernel(seed_ref, x_ref, w1_ref, b1_ref, w2_ref, b2_ref, w3_ref, b3_ref,
               o_ref, *, dropout_rate, training):
    """Fused MLP forward for one batch tile."""
    x = x_ref[...]

    # ----- Layer 1 -----
    # n_in == 1 is a degenerate K=1 contraction: do it on the VPU as a broadcast
    # outer product instead of pushing a ~1%-utilized matmul through the MXU.
    if x_ref.shape[1] == 1:
        h1 = x * w1_ref[...] + b1_ref[...]            # (TB,1)*(1,H1) -> (TB,H1)
    else:
        h1 = jnp.dot(x, w1_ref[...], preferred_element_type=jnp.float32) + b1_ref[...]
    h1 = jnp.maximum(h1, 0.0)

    apply_dropout = training and dropout_rate > 0.0
    if apply_dropout:
        keep = 1.0 - dropout_rate
        # P(bits < thresh) == keep (to within 2^-32); keep < 1.0 guaranteed here.
        thresh = jnp.uint32(min(int(keep * 4294967296.0), 4294967295))
        inv_keep = jnp.float32(1.0 / keep)
        # Mix the grid step into the seed so batch tiles get independent masks.
        base = (seed_ref[0].astype(jnp.uint32) * jnp.uint32(0x9E3779B9)
                + (pl.program_id(0) + 1).astype(jnp.uint32) * jnp.uint32(0x85EBCA6B))
        bits1 = _uniform_bits(h1.shape, base, 0x68BC21EB)
        # Single select + mul (no bool->f32 cast, no second multiply).
        h1 = jnp.where(bits1 < thresh, h1 * inv_keep, 0.0)

    # ----- Layer 2 -----
    h2 = jnp.dot(h1, w2_ref[...], preferred_element_type=jnp.float32) + b2_ref[...]
    h2 = jnp.maximum(h2, 0.0)

    if apply_dropout:
        bits2 = _uniform_bits(h2.shape, base, 0x2C7F6A1D)
        h2 = jnp.where(bits2 < thresh, h2 * inv_keep, 0.0)

    # ----- Output layer -----
    out = jnp.dot(h2, w3_ref[...], preferred_element_type=jnp.float32) + b3_ref[...]
    o_ref[...] = out.astype(o_ref.dtype)


def mlp_forward(params, x, *, seed=0, dropout_rate=0.2, training=False, block_b=None):
    """Fused Pallas MLP forward.

    `training` gives PyTorch nn.Dropout semantics: identity in eval mode,
    inverted dropout in train mode (for MC-dropout call with training=True and
    different seeds).
    """
    w1, b1, w2, b2, w3, b3 = params
    B, n_in = x.shape
    n_h1, n_h2, n_out = w1.shape[1], w2.shape[1], w3.shape[1]

    # Batch tile: multiple of 8 (f32 sublanes); 1024 keeps double-buffered x/out
    # plus live activations far under v7x's 64 MiB VMEM.
    if block_b is None:
        block_b = 1024
    tb = min(block_b, max(B, 8))
    tb = max(8, (tb // 8) * 8)
    b_pad = pl.cdiv(B, tb) * tb
    if b_pad != B:
        x = jnp.pad(x, ((0, b_pad - B), (0, 0)))
    grid = (b_pad // tb,)

    kernel = functools.partial(
        mlp_kernel, dropout_rate=float(dropout_rate), training=bool(training))
    seed_arr = jnp.asarray([seed], dtype=jnp.int32)

    # Weights / biases: whole-array blocks, resident across all grid steps.
    full = lambda i, seed_ref: (0, 0)

    flops = 2 * b_pad * (n_in * n_h1 + n_h1 * n_h2 + n_h2 * n_out)
    bytes_accessed = 4 * (b_pad * n_in + b_pad * n_out + n_in * n_h1 + n_h1
                          + n_h1 * n_h2 + n_h2 + n_h2 * n_out + n_out)

    out = pl.pallas_call(
        kernel,
        out_shape=jax.ShapeDtypeStruct((b_pad, n_out), x.dtype),
        grid_spec=pltpu.PrefetchScalarGridSpec(
            num_scalar_prefetch=1,
            grid=grid,
            in_specs=[
                pl.BlockSpec((tb, n_in), lambda i, seed_ref: (i, 0)),
                pl.BlockSpec((n_in, n_h1), full),
                pl.BlockSpec((1, n_h1), full),
                pl.BlockSpec((n_h1, n_h2), full),
                pl.BlockSpec((1, n_h2), full),
                pl.BlockSpec((n_h2, n_out), full),
                pl.BlockSpec((1, n_out), full),
            ],
            out_specs=pl.BlockSpec((tb, n_out), lambda i, seed_ref: (i, 0)),
        ),
        compiler_params=pltpu.CompilerParams(
            dimension_semantics=("parallel",)),
        cost_estimate=pl.CostEstimate(
            flops=flops, transcendentals=0, bytes_accessed=bytes_accessed),
    )(seed_arr, x, w1, b1, w2, b2, w3, b3)

    # NOTE: for MC-dropout at scale, stack S samples along the lane axis (output
    # (B, S), one seed per sample) in a single call to make the n_out=1 store
    # lane-dense and amortize per-call overhead.
    return out[:B] if b_pad != B else out


def init_mlp_params(key, n_in, n_hidden1, n_hidden2, n_out):
    """Deterministic init mirroring nn.Linear default (uniform +/- 1/sqrt(fan_in))."""
    def linear(k, fan_in, fan_out):
        kw, kb = jax.random.split(k)
        bound = 1.0 / jnp.sqrt(jnp.float32(fan_in))
        w = jax.random.uniform(kw, (fan_in, fan_out), jnp.float32, -bound, bound)
        b = jax.random.uniform(kb, (1, fan_out), jnp.float32, -bound, bound)
        return w, b

    k1, k2, k3 = jax.random.split(key, 3)
    w1, b1 = linear(k1, n_in, n_hidden1)
    w2, b2 = linear(k2, n_hidden1, n_hidden2)
    w3, b3 = linear(k3, n_hidden2, n_out)
    return (w1, b1, w2, b2, w3, b3)


def mlp_reference_eval(params, x):
    """Pure-JAX reference for eval mode (dropout == identity)."""
    w1, b1, w2, b2, w3, b3 = params
    h1 = jnp.maximum(x @ w1 + b1, 0.0)
    h2 = jnp.maximum(h1 @ w2 + b2, 0.0)
    return h2 @ w3 + b3


if __name__ == "__main__":
    # Small shapes consistent with the module: n_in=1, n_out=1, hidden sizes 32.
    B, N_IN, N_H1, N_H2, N_OUT = 16, 1, 32, 32, 1
    DROPOUT_RATE = 0.2

    key = jax.random.PRNGKey(0)
    kx, kp = jax.random.split(key)
    x = jax.random.normal(kx, (B, N_IN), dtype=jnp.float32)
    params = init_mlp_params(kp, N_IN, N_H1, N_H2, N_OUT)

    # Eval-mode forward (dropout identity) -- check against pure-JAX reference.
    # block_b=8 -> grid of 2 batch tiles, exercising the pipelined grid path.
    y_eval = jax.block_until_ready(
        mlp_forward(params, x, dropout_rate=DROPOUT_RATE, training=False, block_b=8))
    y_ref = mlp_reference_eval(params, x)
    assert y_eval.shape == (B, N_OUT)
    assert jnp.allclose(y_eval, y_ref, atol=1e-5, rtol=1e-5)

    # Train-mode / MC-dropout forward (dropout active, in-kernel counter-based PRNG).
    y_mcd = jax.block_until_ready(
        mlp_forward(params, x, seed=123, dropout_rate=DROPOUT_RATE, training=True, block_b=8))
    assert y_mcd.shape == (B, N_OUT)
    assert bool(jnp.all(jnp.isfinite(y_mcd)))

    print("KERNEL_OK")
</pallas_src>

<mosaic_0001>
module attributes {stable_mosaic.version = 11 : i64} {
  func.func @mlp_kernel(%arg0: i32, %arg1: memref<1xi32, #tpu.memory_space<smem>>, %arg2: memref<8x1xf32, #tpu.memory_space<vmem>>, %arg3: memref<1x32xf32, #tpu.memory_space<vmem>>, %arg4: memref<1x32xf32, #tpu.memory_space<vmem>>, %arg5: memref<32x32xf32, #tpu.memory_space<vmem>>, %arg6: memref<1x32xf32, #tpu.memory_space<vmem>>, %arg7: memref<32x1xf32, #tpu.memory_space<vmem>>, %arg8: memref<1x1xf32, #tpu.memory_space<vmem>>, %arg9: memref<8x1xf32, #tpu.memory_space<vmem>>) attributes {dimension_semantics = [#tpu.dimension_semantics<parallel>], iteration_bounds = array<i64: 2>, scalar_prefetch = 1 : i64, scratch_operands = 0 : i64, tpu.core_type = #tpu.core_type<tc>, window_params = [{transform_indices = @transform_0, window_bounds = array<i64: 8, 1>}, {pipeline_mode = #tpu.pipeline_mode<synchronous>, transform_indices = @transform_1, window_bounds = array<i64: 1, 32>}, {pipeline_mode = #tpu.pipeline_mode<synchronous>, transform_indices = @transform_2, window_bounds = array<i64: 1, 32>}, {pipeline_mode = #tpu.pipeline_mode<synchronous>, transform_indices = @transform_3, window_bounds = array<i64: 32, 32>}, {pipeline_mode = #tpu.pipeline_mode<synchronous>, transform_indices = @transform_4, window_bounds = array<i64: 1, 32>}, {pipeline_mode = #tpu.pipeline_mode<synchronous>, transform_indices = @transform_5, window_bounds = array<i64: 32, 1>}, {pipeline_mode = #tpu.pipeline_mode<synchronous>, transform_indices = @transform_6, window_bounds = array<i64: 1, 1>}, {transform_indices = @transform_7, window_bounds = array<i64: 8, 1>}]} {
    %c0 = arith.constant 0 : index
    %c0_0 = arith.constant 0 : index
    %0 = vector.load %arg2[%c0, %c0_0] : memref<8x1xf32, #tpu.memory_space<vmem>>, vector<8x1xf32>
    %c0_1 = arith.constant 0 : index
    %c0_2 = arith.constant 0 : index
    %1 = vector.load %arg3[%c0_1, %c0_2] : memref<1x32xf32, #tpu.memory_space<vmem>>, vector<1x32xf32>
    %2 = vector.broadcast %0 : vector<8x1xf32> to vector<8x32xf32>
    %3 = vector.broadcast %1 : vector<1x32xf32> to vector<8x32xf32>
    %4 = arith.mulf %2, %3 : vector<8x32xf32>
    %c0_3 = arith.constant 0 : index
    %c0_4 = arith.constant 0 : index
    %5 = vector.load %arg4[%c0_3, %c0_4] : memref<1x32xf32, #tpu.memory_space<vmem>>, vector<1x32xf32>
    %6 = vector.broadcast %5 : vector<1x32xf32> to vector<8x32xf32>
    %7 = arith.addf %4, %6 : vector<8x32xf32>
    %cst = arith.constant 0.000000e+00 : f32
    %8 = vector.broadcast %cst : f32 to vector<8x32xf32>
    %9 = arith.maximumf %7, %8 : vector<8x32xf32>
    %c0_5 = arith.constant 0 : index
    %c0_6 = arith.constant 0 : index
    %10 = vector.load %arg5[%c0_5, %c0_6] : memref<32x32xf32, #tpu.memory_space<vmem>>, vector<32x32xf32>
    %cst_7 = arith.constant dense<0.000000e+00> : vector<8x32xf32>
    %11 = tpu.matmul %9, %10, %cst_7 {dimension_numbers = #tpu.dot_dimension_numbers<[1], [0], [0], [1], [0, 0, 1, 1], [], []>} : vector<8x32xf32>, vector<32x32xf32>, vector<8x32xf32> -> vector<8x32xf32>
    %c0_8 = arith.constant 0 : index
    %c0_9 = arith.constant 0 : index
    %12 = vector.load %arg6[%c0_8, %c0_9] : memref<1x32xf32, #tpu.memory_space<vmem>>, vector<1x32xf32>
    %13 = vector.broadcast %12 : vector<1x32xf32> to vector<8x32xf32>
    %14 = arith.addf %11, %13 : vector<8x32xf32>
    %cst_10 = arith.constant 0.000000e+00 : f32
    %15 = vector.broadcast %cst_10 : f32 to vector<8x32xf32>
    %16 = arith.maximumf %14, %15 : vector<8x32xf32>
    %c0_11 = arith.constant 0 : index
    %c0_12 = arith.constant 0 : index
    %17 = vector.load %arg7[%c0_11, %c0_12] : memref<32x1xf32, #tpu.memory_space<vmem>>, vector<32x1xf32>
    %cst_13 = arith.constant dense<0.000000e+00> : vector<8x1xf32>
    %18 = tpu.matmul %16, %17, %cst_13 {dimension_numbers = #tpu.dot_dimension_numbers<[1], [0], [0], [1], [0, 0, 1, 1], [], []>} : vector<8x32xf32>, vector<32x1xf32>, vector<8x1xf32> -> vector<8x1xf32>
    %c0_14 = arith.constant 0 : index
    %c0_15 = arith.constant 0 : index
    %19 = vector.load %arg8[%c0_14, %c0_15] : memref<1x1xf32, #tpu.memory_space<vmem>>, vector<1x1xf32>
    %20 = vector.broadcast %19 : vector<1x1xf32> to vector<8x1xf32>
    %21 = arith.addf %18, %20 : vector<8x1xf32>
    %c0_16 = arith.constant 0 : index
    %c0_17 = arith.constant 0 : index
    %22 = vector.load %arg9[%c0_16, %c0_17] : memref<8x1xf32, #tpu.memory_space<vmem>>, vector<8x1xf32>
    tpu.vector_store %arg9[%c0_16, %c0_17], %21 {strides = array<i32>} : memref<8x1xf32, #tpu.memory_space<vmem>>, vector<8x1xf32>,
    return
  }
  func.func @transform_0(%arg0: i32, %arg1: memref<1xi32, #tpu.memory_space<smem>>) -> (i32, i32) {
    %c0_i32 = arith.constant 0 : i32
    %c0_i32_0 = arith.constant 0 : i32
    return %arg0, %c0_i32 : i32, i32
  }
  func.func @transform_1(%arg0: i32, %arg1: memref<1xi32, #tpu.memory_space<smem>>) -> (i32, i32) {
    %c0_i32 = arith.constant 0 : i32
    %c0_i32_0 = arith.constant 0 : i32
    %c0_i32_1 = arith.constant 0 : i32
    return %c0_i32, %c0_i32_0 : i32, i32
  }
  func.func @transform_2(%arg0: i32, %arg1: memref<1xi32, #tpu.memory_space<smem>>) -> (i32, i32) {
    %c0_i32 = arith.constant 0 : i32
    %c0_i32_0 = arith.constant 0 : i32
    %c0_i32_1 = arith.constant 0 : i32
    return %c0_i32, %c0_i32_0 : i32, i32
  }
  func.func @transform_3(%arg0: i32, %arg1: memref<1xi32, #tpu.memory_space<smem>>) -> (i32, i32) {
    %c0_i32 = arith.constant 0 : i32
    %c0_i32_0 = arith.constant 0 : i32
    %c0_i32_1 = arith.constant 0 : i32
    return %c0_i32, %c0_i32_0 : i32, i32
  }
  func.func @transform_4(%arg0: i32, %arg1: memref<1xi32, #tpu.memory_space<smem>>) -> (i32, i32) {
    %c0_i32 = arith.constant 0 : i32
    %c0_i32_0 = arith.constant 0 : i32
    %c0_i32_1 = arith.constant 0 : i32
    return %c0_i32, %c0_i32_0 : i32, i32
  }
  func.func @transform_5(%arg0: i32, %arg1: memref<1xi32, #tpu.memory_space<smem>>) -> (i32, i32) {
    %c0_i32 = arith.constant 0 : i32
    %c0_i32_0 = arith.constant 0 : i32
    %c0_i32_1 = arith.constant 0 : i32
    return %c0_i32, %c0_i32_0 : i32, i32
  }
  func.func @transform_6(%arg0: i32, %arg1: memref<1xi32, #tpu.memory_space<smem>>) -> (i32, i32) {
    %c0_i32 = arith.constant 0 : i32
    %c0_i32_0 = arith.constant 0 : i32
    %c0_i32_1 = arith.constant 0 : i32
    return %c0_i32, %c0_i32_0 : i32, i32
  }
  func.func @transform_7(%arg0: i32, %arg1: memref<1xi32, #tpu.memory_space<smem>>) -> (i32, i32) {
    %c0_i32 = arith.constant 0 : i32
    %c0_i32_0 = arith.constant 0 : i32
    return %arg0, %c0_i32 : i32, i32
  }
}

</mosaic_0001>

<llo_original>
// kernel: tpu_custom_call.1
$region0: #{tpu_custom_call.1}
  #allocation0 [shape = 'u32[]', space=smem, size = 0x4, offset = 0x4, fixed_abs, tag = 'smem constant byte address 0x4 - core index']
  #allocation1 [shape = 'u32[144,128]{1,0:T(1,128)}', space=vmem, size = 0x12000, scoped, tag = 'internal scratch']
  #allocation2 [shape = 's32[1]{0}', space=sflag, size = 0x4, scoped, tag = 'scoped memory for tpu_custom_call.1']
  #allocation3 [shape = 's32[1]{0:T(128)S(6)}', space=smem, size = 0x200, scoped, tag = 'prefetched SMEM operand 0']
  #allocation4 [shape = 'f32[1,1]{1,0:T(1,128)S(1)}', space=vmem, size = 0x200, scoped, tag = 'scoped memory for tpu_custom_call.1']
  %s0 = inlined_call_operand.<no memory space> [shape: s32[1], index: 0, kind: input, shape index: {}]
  %s1 = inlined_call_operand.vmem [shape: f32[16,1], index: 1, kind: input, shape index: {}]
  %s2 = inlined_call_operand.vmem [shape: f32[1,32], index: 2, kind: input, shape index: {}]
  %s3 = inlined_call_operand.vmem [shape: f32[1,32], index: 3, kind: input, shape index: {}]
  %s4 = inlined_call_operand.vmem [shape: f32[32,32], index: 4, kind: input, shape index: {}]
  %s5 = inlined_call_operand.vmem [shape: f32[1,32], index: 5, kind: input, shape index: {}]
  %s6 = inlined_call_operand.vmem [shape: f32[32,1], index: 6, kind: input, shape index: {}]
  %s7 = inlined_call_operand.<no memory space> [shape: f32[1,1], index: 7, kind: input, shape index: {}]
  %s8 = inlined_call_operand.vmem [shape: f32[16,1], index: 8, kind: output, shape index: {}]
  %s9 = sld [smem:[#allocation0]]
  $region61: #{tpu_custom_call.1} parent=0
    _
  %s11 = ssub.s32 1, %s9
  %s12 = scalar_select 0, %s11, %s9
  %13 = sst [smem:[#allocation3]] %s0
  %v14 = vstv %s7
  %15 = vst [vmem:[#allocation4] sm:$0x1] %v14
  loop: start=0, step=1, limit=4
  $region2: #{tpu_custom_call.1} parent=0 // loop_pre_header
    _
  $region3: #{tpu_custom_call.1} parent=0 // loop_header
    %s17 = sphi 0, %s21
    %p18 = scmp.ge.s32.totalorder %s17, 4
    %s27 = sphi 0, %s29
    %s30 = sphi 0, %s27
    %s31 = sphi 0, %s30
    %s47 = sphi 0, %s31
    %s51 = sphi 0, %s51
    %s53 = sphi 0, %s51
    %s54 = sphi 0, %s53
    %s68 = sphi 0, %s54
    %s72 = sphi 0, %s72
    %s74 = sphi 0, %s72
    %s75 = sphi 0, %s74
    %s89 = sphi 0, %s75
    %s93 = sphi 0, %s93
    %s95 = sphi 0, %s93
    %s96 = sphi 0, %s95
    %s110 = sphi 0, %s96
    %s114 = sphi 0, %s114
    %s116 = sphi 0, %s114
    %s117 = sphi 0, %s116
    %s131 = sphi 0, %s117
    %s135 = sphi 0, %s135
    %s137 = sphi 0, %s135
    %s138 = sphi 0, %s137
    %s152 = sphi 0, %s138
    %s156 = sphi 0, %s156
    %s158 = sphi 0, %s156
    %s159 = sphi 0, %s158
    %s173 = sphi 0, %s159
    %s179 = sphi 0, %s181
    %s182 = sphi 0, %s179
    %s183 = sphi 0, %s182
    %s199 = sphi 0, %s183
  $region4: #{tpu_custom_call.1} parent=0 // loop_header_branch
    %20 = sbr.rel (%p18) target = $region8
  $region5: #{tpu_custom_call.1} parent=0 // loop_body
    %s22 = ssub.s32 %s17, 1
    %s23 = ssub.s32 %s17, 2
    %s24 = sadd.s32 %s17, 1
    %s25 = ssub.s32 %s17, %s24
    %p26 = scmp.eq.s32.totalorder %s25, 0
    %s28 = sadd.s32 %s27, 1
    %s29 = scalar_select %p26, %s27, %s28
    %p32 = pneg %p26
    %p33 = scmp.eq.s32.totalorder %s17, 1
    %p34 = por %p32, %p33
    %p35 = scmp.ne.s32.totalorder %s27, %s30
    %p36 = scmp.eq.s32.totalorder %s17, 0
    %p37 = por %p35, %p36
    %p38 = scmp.ne.s32.totalorder %s27, %s30
    %p39 = scmp.eq.s32.totalorder %s22, 1
    %p40 = por %p38, %p39
    %p41 = scmp.ne.s32.totalorder %s30, %s31
    %p42 = scmp.eq.s32.totalorder %s22, 0
    %p43 = por %p41, %p42
    %p44 = scmp.ne.s32.totalorder %s30, %s31
    %p45 = scmp.eq.s32.totalorder %s23, 1
    %p46 = por %p44, %p45
    %p48 = scmp.ne.s32.totalorder %s31, %s47
    %p49 = scmp.eq.s32.totalorder %s23, 0
    %p50 = por %p48, %p49
    %s52 = sadd.s32 %s51, 1
    %p55 = scmp.eq.s32.totalorder %s17, 1
    %p56 = scmp.ne.s32.totalorder %s51, %s53
    %p57 = scmp.eq.s32.totalorder %s17, 0
    %p58 = por %p56, %p57
    %p59 = scmp.ne.s32.totalorder %s51, %s53
    %p60 = scmp.eq.s32.totalorder %s22, 1
    %p61 = por %p59, %p60
    %p62 = scmp.ne.s32.totalorder %s53, %s54
    %p63 = scmp.eq.s32.totalorder %s22, 0
    %p64 = por %p62, %p63
    %p65 = scmp.ne.s32.totalorder %s53, %s54
    %p66 = scmp.eq.s32.totalorder %s23, 1
    %p67 = por %p65, %p66
    %p69 = scmp.ne.s32.totalorder %s54, %s68
    %p70 = scmp.eq.s32.totalorder %s23, 0
    %p71 = por %p69, %p70
    %s73 = sadd.s32 %s72, 1
    %p76 = scmp.eq.s32.totalorder %s17, 1
    %p77 = scmp.ne.s32.totalorder %s72, %s74
    %p78 = scmp.eq.s32.totalorder %s17, 0
    %p79 = por %p77, %p78
    %p80 = scmp.ne.s32.totalorder %s72, %s74
    %p81 = scmp.eq.s32.totalorder %s22, 1
    %p82 = por %p80, %p81
    %p83 = scmp.ne.s32.totalorder %s74, %s75
    %p84 = scmp.eq.s32.totalorder %s22, 0
    %p85 = por %p83, %p84
    %p86 = scmp.ne.s32.totalorder %s74, %s75
    %p87 = scmp.eq.s32.totalorder %s23, 1
    %p88 = por %p86, %p87
    %p90 = scmp.ne.s32.totalorder %s75, %s89
    %p91 = scmp.eq.s32.totalorder %s23, 0
    %p92 = por %p90, %p91
    %s94 = sadd.s32 %s93, 1
    %p97 = scmp.eq.s32.totalorder %s17, 1
    %p98 = scmp.ne.s32.totalorder %s93, %s95
    %p99 = scmp.eq.s32.totalorder %s17, 0
    %p100 = por %p98, %p99
    %p101 = scmp.ne.s32.totalorder %s93, %s95
    %p102 = scmp.eq.s32.totalorder %s22, 1
    %p103 = por %p101, %p102
    %p104 = scmp.ne.s32.totalorder %s95, %s96
    %p105 = scmp.eq.s32.totalorder %s22, 0
    %p106 = por %p104, %p105
    %p107 = scmp.ne.s32.totalorder %s95, %s96
    %p108 = scmp.eq.s32.totalorder %s23, 1
    %p109 = por %p107, %p108
    %p111 = scmp.ne.s32.totalorder %s96, %s110
    %p112 = scmp.eq.s32.totalorder %s23, 0
    %p113 = por %p111, %p112
    %s115 = sadd.s32 %s114, 1
    %p118 = scmp.eq.s32.totalorder %s17, 1
    %p119 = scmp.ne.s32.totalorder %s114, %s116
    %p120 = scmp.eq.s32.totalorder %s17, 0
    %p121 = por %p119, %p120
    %p122 = scmp.ne.s32.totalorder %s114, %s116
    %p123 = scmp.eq.s32.totalorder %s22, 1
    %p124 = por %p122, %p123
    %p125 = scmp.ne.s32.totalorder %s116, %s117
    %p126 = scmp.eq.s32.totalorder %s22, 0
    %p127 = por %p125, %p126
    %p128 = scmp.ne.s32.totalorder %s116, %s117
    %p129 = scmp.eq.s32.totalorder %s23, 1
    %p130 = por %p128, %p129
    %p132 = scmp.ne.s32.totalorder %s117, %s131
    %p133 = scmp.eq.s32.totalorder %s23, 0
    %p134 = por %p132, %p133
    %s136 = sadd.s32 %s135, 1
    %p139 = scmp.eq.s32.totalorder %s17, 1
    %p140 = scmp.ne.s32.totalorder %s135, %s137
    %p141 = scmp.eq.s32.totalorder %s17, 0
    %p142 = por %p140, %p141
    %p143 = scmp.ne.s32.totalorder %s135, %s137
    %p144 = scmp.eq.s32.totalorder %s22, 1
    %p145 = por %p143, %p144
    %p146 = scmp.ne.s32.totalorder %s137, %s138
    %p147 = scmp.eq.s32.totalorder %s22, 0
    %p148 = por %p146, %p147
    %p149 = scmp.ne.s32.totalorder %s137, %s138
    %p150 = scmp.eq.s32.totalorder %s23, 1
    %p151 = por %p149, %p150
    %p153 = scmp.ne.s32.totalorder %s138, %s152
    %p154 = scmp.eq.s32.totalorder %s23, 0
    %p155 = por %p153, %p154
    %s157 = sadd.s32 %s156, 1
    %p160 = scmp.eq.s32.totalorder %s17, 1
    %p161 = scmp.ne.s32.totalorder %s156, %s158
    %p162 = scmp.eq.s32.totalorder %s17, 0
    %p163 = por %p161, %p162
    %p164 = scmp.ne.s32.totalorder %s156, %s158
    %p165 = scmp.eq.s32.totalorder %s22, 1
    %p166 = por %p164, %p165
    %p167 = scmp.ne.s32.totalorder %s158, %s159
    %p168 = scmp.eq.s32.totalorder %s22, 0
    %p169 = por %p167, %p168
    %p170 = scmp.ne.s32.totalorder %s158, %s159
    %p171 = scmp.eq.s32.totalorder %s23, 1
    %p172 = por %p170, %p171
    %p174 = scmp.ne.s32.totalorder %s159, %s173
    %p175 = scmp.eq.s32.totalorder %s23, 0
    %p176 = por %p174, %p175
    %s177 = ssub.s32 %s17, %s24
    %p178 = scmp.eq.s32.totalorder %s177, 0
    %s180 = sadd.s32 %s179, 1
    %s181 = scalar_select %p178, %s179, %s180
    %p184 = pneg %p178
    %p185 = scmp.eq.s32.totalorder %s17, 1
    %p186 = por %p184, %p185
    %p187 = scmp.ne.s32.totalorder %s179, %s182
    %p188 = scmp.eq.s32.totalorder %s17, 0
    %p189 = por %p187, %p188
    %p190 = scmp.ne.s32.totalorder %s179, %s182
    %p191 = scmp.eq.s32.totalorder %s22, 1
    %p192 = por %p190, %p191
    %p193 = scmp.ne.s32.totalorder %s182, %s183
    %p194 = scmp.eq.s32.totalorder %s22, 0
    %p195 = por %p193, %p194
    %p196 = scmp.ne.s32.totalorder %s182, %s183
    %p197 = scmp.eq.s32.totalorder %s23, 1
    %p198 = por %p196, %p197
    %p200 = scmp.ne.s32.totalorder %s183, %s199
    %p201 = scmp.eq.s32.totalorder %s23, 0
    %p202 = por %p200, %p201
    %p203 = scmp.le.s32.totalorder 1, %s17
    %p204 = scmp.lt.s32.totalorder %s17, 3
    %p205 = pnand %p203, %p204
    %p206 = pneg %p205
    // Predicated region
    $region9: #{tpu_custom_call.1} parent=5 // pred_check
      _
    $region10: #{tpu_custom_call.1} parent=5 // pred_check_branch
      %208 = sbr.rel (%p205) target = $region12
    $region11: #{tpu_custom_call.1} parent=5 // pred_region
      %s209 = ssub.s32 %s17, 1
      // Predicated region
      $region13: #{tpu_custom_call.1} parent=11 // pred_check
        %p210 = pneg %p64
      $region14: #{tpu_custom_call.1} parent=11 // pred_check_branch
        %212 = sbr.rel (%p210) target = $region16
      $region15: #{tpu_custom_call.1} parent=11 // pred_region
        _
      $region16: #{tpu_custom_call.1} parent=11 // pred_fallthru
        _
      // Predicated region
      $region17: #{tpu_custom_call.1} parent=11 // pred_check
        %p213 = pneg %p85
      $region18: #{tpu_custom_call.1} parent=11 // pred_check_branch
        %215 = sbr.rel (%p213) target = $region20
      $region19: #{tpu_custom_call.1} parent=11 // pred_region
        _
      $region20: #{tpu_custom_call.1} parent=11 // pred_fallthru
        _
      // Predicated region
      $region21: #{tpu_custom_call.1} parent=11 // pred_check
        %p216 = pneg %p106
      $region22: #{tpu_custom_call.1} parent=11 // pred_check_branch
        %218 = sbr.rel (%p216) target = $region24
      $region23: #{tpu_custom_call.1} parent=11 // pred_region
        _
      $region24: #{tpu_custom_call.1} parent=11 // pred_fallthru
        _
      // Predicated region
      $region25: #{tpu_custom_call.1} parent=11 // pred_check
        %p219 = pneg %p127
      $region26: #{tpu_custom_call.1} parent=11 // pred_check_branch
        %221 = sbr.rel (%p219) target = $region28
      $region27: #{tpu_custom_call.1} parent=11 // pred_region
        _
      $region28: #{tpu_custom_call.1} parent=11 // pred_fallthru
        _
      // Predicated region
      $region29: #{tpu_custom_call.1} parent=11 // pred_check
        %p222 = pneg %p148
      $region30: #{tpu_custom_call.1} parent=11 // pred_check_branch
        %224 = sbr.rel (%p222) target = $region32
      $region31: #{tpu_custom_call.1} parent=11 // pred_region
        _
      $region32: #{tpu_custom_call.1} parent=11 // pred_fallthru
        _
      // Predicated region
      $region33: #{tpu_custom_call.1} parent=11 // pred_check
        %p225 = pneg %p169
      $region34: #{tpu_custom_call.1} parent=11 // pred_check_branch
        %227 = sbr.rel (%p225) target = $region36
      $region35: #{tpu_custom_call.1} parent=11 // pred_region
        _
      $region36: #{tpu_custom_call.1} parent=11 // pred_fallthru
        _
    $region12: #{tpu_custom_call.1} parent=5 // pred_fallthru
      _
    %p228 = scmp.lt.s32.totalorder %s17, 2
    // Predicated region
    $region37: #{tpu_custom_call.1} parent=5 // pred_check
      %p229 = pneg %p228
    $region38: #{tpu_custom_call.1} parent=5 // pred_check_branch
      %231 = sbr.rel (%p229) target = $region40
    $region39: #{tpu_custom_call.1} parent=5 // pred_region
      // Predicated region
      $region41: #{tpu_custom_call.1} parent=39 // pred_check
        %p232 = pneg %p37
      $region42: #{tpu_custom_call.1} parent=39 // pred_check_branch
        %234 = sbr.rel (%p232) target = $region44
      $region43: #{tpu_custom_call.1} parent=39 // pred_region
        %p235 = scmp.lt.s32.totalorder %s17, 1
        %s236 = scalar_select %p235, %s17, 1
        %s237 = smul.addr %s236, 8
        %s238 = scalar_lea.vmem %s1, %s237
      $region44: #{tpu_custom_call.1} parent=39 // pred_fallthru
        _
    $region40: #{tpu_custom_call.1} parent=5 // pred_fallthru
      _
    %p239 = scmp.le.s32.totalorder 1, %s17
    %p240 = scmp.lt.s32.totalorder %s17, 3
    %p241 = pnand %p239, %p240
    %p242 = pneg %p241
    // Predicated region
    $region45: #{tpu_custom_call.1} parent=5 // pred_check
      _
    $region46: #{tpu_custom_call.1} parent=5 // pred_check_branch
      %244 = sbr.rel (%p241) target = $region48
    $region47: #{tpu_custom_call.1} parent=5 // pred_region
      %s245 = ssub.s32 %s17, 1
      %p246 = scmp.lt.s32.totalorder %s22, 1
      %s247 = scalar_select %p246, %s22, 1
      %s248 = smul.addr %s247, 8
      %s249 = scalar_lea.vmem %s1, %s248
      %p250 = pneg %p43
      %p251 = pneg %p40
      %p252 = pneg %p64
      %p253 = pneg %p61
      %p254 = pneg %p85
      %p255 = pneg %p82
      %p256 = pneg %p106
      %p257 = pneg %p103
      %p258 = pneg %p127
      %p259 = pneg %p124
      %p260 = pneg %p148
      %p261 = pneg %p145
      %p262 = pneg %p169
      %p263 = pneg %p166
      %p264 = pneg %p195
      %p265 = pneg %p192
      %p266 = scmp.lt.s32.totalorder %s22, 1
      %s267 = scalar_select %p266, %s22, 1
      %s268 = smul.addr %s267, 8
      %s269 = scalar_lea.vmem %s8, %s268
      %p270 = scmp.lt.s32.totalorder %s22, 1
      %s271 = scalar_select %p270, %s22, 1
      %s272 = smul.addr %s271, 8
      %s273 = scalar_lea.vmem %s1, %s272
      %p274 = scmp.lt.s32.totalorder %s22, 1
      %s275 = scalar_select %p274, %s22, 1
      %s276 = smul.addr %s275, 8
      %s277 = scalar_lea.vmem %s8, %s276
      %v278 = vld [vmem:[%s273] sm:$0xff]
      %v279 = vld [vmem:[%s2] sm:$0x1]
      %281 = vset.pattern.permute.xlu0 0
      %282 = vperm.xlu0 %281, %v278
      %v283 = vpop.permute.xlu0 %282
      %v286 = vlaneseq
      %v287 = vshrl.u32 %v286, 7
      %v288 = vsub.s32 0, %v287
      %v289 = vrot.slane %v279, %v288
      %v291 = vmul.f32 %v283, %v289
      %v292 = vld [vmem:[%s3] sm:$0x1]
      %v294 = vlaneseq
      %v295 = vshrl.u32 %v294, 7
      %v296 = vsub.s32 0, %v295
      %v297 = vrot.slane %v292, %v296
      %v299 = vadd.f32 %v291, %v297
      %v300 = vmax.f32 %v299, 0.0
      %v301 = vld [vmem:[%s4] sm:$0xff]
      %v302 = vld [vmem:[%s4 + $0x8] sm:$0xff]
      %v303 = vld [vmem:[%s4 + $0x10] sm:$0xff]
      %v304 = vld [vmem:[%s4 + $0x18] sm:$0xff]
      %v305 = vld [vmem:[%s5] sm:$0x1]
      %v307 = vlaneseq
      %v308 = vshrl.u32 %v307, 7
      %v309 = vsub.s32 0, %v308
      %v310 = vrot.slane %v305, %v309
      %vm312 = vcmask 261120
      %v314 = vsel %vm312, %v300, 0
      %316 = vmatprep.subr.mxu0 0.0
      %317 = vmatpush1.msra.mxu0 %v301
      %318 = vmatprep.subr.mxu0 0.0
      %319 = vmatpush1.msra.mxu0 %v302
      %320 = vmatprep.subr.mxu0 0.0
      %321 = vmatpush1.msra.mxu0 %v303
      %322 = vmatprep.subr.mxu0 0.0
      %323 = vmatpush1.msra.mxu0 %v304
      %324 = vmatprep.subr.mxu0 0.0
      %325 = vmatpush1.msra.mxu0 0.0
      %326 = vmatprep.subr.mxu0 0.0
      %327 = vmatpush1.msra.mxu0 0.0
      %328 = vmatprep.subr.mxu0 0.0
      %329 = vmatpush1.msra.mxu0 0.0
      %330 = vmatprep.subr.mxu0 0.0
      %331 = vmatpush1.msra.mxu0 0.0
      %332 = vmatprep.subr.mxu0 0.0
      %333 = vmatpush1.msra.mxu0 0.0
      %334 = vmatprep.subr.mxu0 0.0
      %335 = vmatpush1.msra.mxu0 0.0
      %336 = vmatprep.subr.mxu0 0.0
      %337 = vmatpush1.msra.mxu0 0.0
      %338 = vmatprep.subr.mxu0 0.0
      %339 = vmatpush1.msra.mxu0 0.0
      %340 = vmatprep.subr.mxu0 0.0
      %341 = vmatpush1.msra.mxu0 0.0
      %342 = vmatprep.subr.mxu0 0.0
      %343 = vmatpush1.msra.mxu0 0.0
      %344 = vmatprep.subr.mxu0 0.0
      %345 = vmatpush1.msra.mxu0 0.0
      %346 = vmatprep.subr.mxu0 0.0
      %347 = vmatpush1.msra.mxu0 0.0
      %348 = vmatprep.subr.mxu0 0.0
      %349 = vmatpush1.msra.mxu0 0.0
      %350 = vmatprep.subr.mxu0 0.0
      %351 = vmatpush1.msra.mxu0 0.0
      %352 = vmatprep.subr.mxu0 0.0
      %353 = vmatpush1.msra.mxu0 0.0
      %354 = vmatprep.subr.mxu0 0.0
      %355 = vmatpush1.msra.mxu0 0.0
      %356 = vmatprep.subr.mxu0 0.0
      %357 = vmatpush1.msra.mxu0 0.0
      %358 = vmatprep.subr.mxu0 0.0
      %359 = vmatpush1.msra.mxu0 0.0
      %360 = vmatprep.subr.mxu0 0.0
      %361 = vmatpush1.msra.mxu0 0.0
      %362 = vmatprep.subr.mxu0 0.0
      %363 = vmatpush1.msra.mxu0 0.0
      %364 = vmatprep.subr.mxu0 0.0
      %365 = vmatpush1.msra.mxu0 0.0
      %366 = vmatprep.subr.mxu0 0.0
      %367 = vmatpush1.msra.mxu0 0.0
      %368 = vmatprep.subr.mxu0 0.0
      %369 = vmatpush1.msra.mxu0 0.0
      %370 = vmatprep.subr.mxu0 0.0
      %371 = vmatpush1.msra.mxu0 0.0
      %372 = vmatprep.subr.mxu0 0.0
      %373 = vmatpush1.msra.mxu0 0.0
      %374 = vmatprep.subr.mxu0 0.0
      %375 = vmatpush1.msra.mxu0 0.0
      %376 = vmatprep.subr.mxu0 0.0
      %377 = vmatpush1.msra.mxu0 0.0
      %378 = vmatprep.subr.mxu0 0.0
      %379 = vmatpush1.msra.mxu0 0.0
      %380 = vmatprep.mubr.f32.mxu0 0.0
      %381 = vmatmul.mubr.f32.gmra.mrb[0].mxu0 %v314
      %v382 = vpop.f32.mrb[0].mxu0
      %v383 = vadd.f32 %v310, %v382
      %v384 = vpop.f32.mrb[0].mxu0
      %385 = vdwg.mxu0
      %v386 = vmax.f32 %v383, 0.0
      %v387 = vld [vmem:[%s6] sm:$0xff]
      %v388 = vld [vmem:[%s6 + $0x8] sm:$0xff]
      %v389 = vld [vmem:[%s6 + $0x10] sm:$0xff]
      %v390 = vld [vmem:[%s6 + $0x18] sm:$0xff]
      %v391 = vld [vmem:[#allocation4] sm:$0x1]
      %v393 = vlaneseq
      %v394 = vshrl.u32 %v393, 7
      %v395 = vsub.s32 0, %v394
      %v396 = vrot.slane %v391, %v395
      %v399 = vsel %vm312, %v386, 0
      %401 = vmatprep.subr.mxu0 0.0
      %402 = vmatpush1.msra.mxu0 %v387
      %403 = vmatprep.subr.mxu0 0.0
      %404 = vmatpush1.msra.mxu0 %v388
      %405 = vmatprep.subr.mxu0 0.0
      %406 = vmatpush1.msra.mxu0 %v389
      %407 = vmatprep.subr.mxu0 0.0
      %408 = vmatpush1.msra.mxu0 %v390
      %409 = vmatprep.subr.mxu0 0.0
      %410 = vmatpush1.msra.mxu0 0.0
      %411 = vmatprep.subr.mxu0 0.0
      %412 = vmatpush1.msra.mxu0 0.0
      %413 = vmatprep.subr.mxu0 0.0
      %414 = vmatpush1.msra.mxu0 0.0
      %415 = vmatprep.subr.mxu0 0.0
      %416 = vmatpush1.msra.mxu0 0.0
      %417 = vmatprep.subr.mxu0 0.0
      %418 = vmatpush1.msra.mxu0 0.0
      %419 = vmatprep.subr.mxu0 0.0
      %420 = vmatpush1.msra.mxu0 0.0
      %421 = vmatprep.subr.mxu0 0.0
      %422 = vmatpush1.msra.mxu0 0.0
      %423 = vmatprep.subr.mxu0 0.0
      %424 = vmatpush1.msra.mxu0 0.0
      %425 = vmatprep.subr.mxu0 0.0
      %426 = vmatpush1.msra.mxu0 0.0
      %427 = vmatprep.subr.mxu0 0.0
      %428 = vmatpush1.msra.mxu0 0.0
      %429 = vmatprep.subr.mxu0 0.0
      %430 = vmatpush1.msra.mxu0 0.0
      %431 = vmatprep.subr.mxu0 0.0
      %432 = vmatpush1.msra.mxu0 0.0
      %433 = vmatprep.subr.mxu0 0.0
      %434 = vmatpush1.msra.mxu0 0.0
      %435 = vmatprep.subr.mxu0 0.0
      %436 = vmatpush1.msra.mxu0 0.0
      %437 = vmatprep.subr.mxu0 0.0
      %438 = vmatpush1.msra.mxu0 0.0
      %439 = vmatprep.subr.mxu0 0.0
      %440 = vmatpush1.msra.mxu0 0.0
      %441 = vmatprep.subr.mxu0 0.0
      %442 = vmatpush1.msra.mxu0 0.0
      %443 = vmatprep.subr.mxu0 0.0
      %444 = vmatpush1.msra.mxu0 0.0
      %445 = vmatprep.subr.mxu0 0.0
      %446 = vmatpush1.msra.mxu0 0.0
      %447 = vmatprep.subr.mxu0 0.0
      %448 = vmatpush1.msra.mxu0 0.0
      %449 = vmatprep.subr.mxu0 0.0
      %450 = vmatpush1.msra.mxu0 0.0
      %451 = vmatprep.subr.mxu0 0.0
      %452 = vmatpush1.msra.mxu0 0.0
      %453 = vmatprep.subr.mxu0 0.0
      %454 = vmatpush1.msra.mxu0 0.0
      %455 = vmatprep.subr.mxu0 0.0
      %456 = vmatpush1.msra.mxu0 0.0
      %457 = vmatprep.subr.mxu0 0.0
      %458 = vmatpush1.msra.mxu0 0.0
      %459 = vmatprep.subr.mxu0 0.0
      %460 = vmatpush1.msra.mxu0 0.0
      %461 = vmatprep.subr.mxu0 0.0
      %462 = vmatpush1.msra.mxu0 0.0
      %463 = vmatprep.subr.mxu0 0.0
      %464 = vmatpush1.msra.mxu0 0.0
      %465 = vmatprep.mubr.f32.mxu0 0.0
      %466 = vmatmul.mubr.f32.gmra.mrb[0].mxu0 %v399
      %v467 = vpop.f32.mrb[0].mxu0
      %v468 = vadd.f32 %v396, %v467
      %v469 = vpop.f32.mrb[0].mxu0
      %470 = vdwg.mxu0
      %vm471 = vcmask 7168
      %472 = vst.msk [vmem:[%s277] sm:$0xff] %vm471, %v468
      %p473 = scmp.lt.s32.totalorder %s22, 1
      %s474 = scalar_select %p473, %s22, 1
      %s475 = smul.addr %s474, 8
      %s476 = scalar_lea.vmem %s8, %s475
      // Predicated region
      $region49: #{tpu_custom_call.1} parent=47 // pred_check
        %p477 = pneg %p192
      $region50: #{tpu_custom_call.1} parent=47 // pred_check_branch
        %479 = sbr.rel (%p477) target = $region52
      $region51: #{tpu_custom_call.1} parent=47 // pred_region
        _
      $region52: #{tpu_custom_call.1} parent=47 // pred_fallthru
        _
    $region48: #{tpu_custom_call.1} parent=5 // pred_fallthru
      _
    %p480 = scmp.le.s32.totalorder 2, %s17
    // Predicated region
    $region53: #{tpu_custom_call.1} parent=5 // pred_check
      %p481 = pneg %p480
    $region54: #{tpu_custom_call.1} parent=5 // pred_check_branch
      %483 = sbr.rel (%p481) target = $region56
    $region55: #{tpu_custom_call.1} parent=5 // pred_region
      %s484 = ssub.s32 %s17, 2
      // Predicated region
      $region57: #{tpu_custom_call.1} parent=55 // pred_check
        %p485 = pneg %p198
      $region58: #{tpu_custom_call.1} parent=55 // pred_check_branch
        %487 = sbr.rel (%p485) target = $region60
      $region59: #{tpu_custom_call.1} parent=55 // pred_region
        %p488 = scmp.lt.s32.totalorder %s23, 1
        %s489 = scalar_select %p488, %s23, 1
        %s490 = smul.addr %s489, 8
        %s491 = scalar_lea.vmem %s8, %s490
      $region60: #{tpu_custom_call.1} parent=55 // pred_fallthru
        _
    $region56: #{tpu_custom_call.1} parent=5 // pred_fallthru
      _
  $region6: #{tpu_custom_call.1} parent=0 // loop_footer
    %s21 = sadd.s32 1, %s17
  $region7: #{tpu_custom_call.1} parent=0 // loop_footer_branch
    %16 = sbr.rel target = $region3
  $region8: #{tpu_custom_call.1} parent=0 // loop_exit
    _

</llo_original>
